<compile_context>
chip_gen: v5e
topology: v5e:2x2
jax: 0.10.0
libtpu: 0.0.40
codegen_flags: <defaults>
</compile_context>

<pallas_src>
import jax
import jax.numpy as jnp
from jax.experimental import pallas as pl
from jax.experimental.pallas import tpu as pltpu


def _round_up(x, m):
    return (x + m - 1) // m * m


def _patch_proj_kernel(x_ref, w_ref, b_ref, o_ref):
    # x_ref: (tm, Kp) bf16 patch rows
    # w_ref: (Kp, N)  bf16 weight, constant index_map -> VMEM-resident
    # b_ref: (1, N)   f32 bias
    # o_ref: (tm, N)  lane-dense output tile (final layout, no post-transpose)
    acc = jnp.dot(x_ref[...], w_ref[...], preferred_element_type=jnp.float32)
    o_ref[...] = (acc + b_ref[...]).astype(o_ref.dtype)


def dinov2_patch_embeddings(pixel_values, weight, bias, patch_size):
    """pixel_values: [B, C, H, W]; weight: [hidden, C, P, P]; bias: [hidden].

    Returns [B, num_patches, hidden] (== Conv2d -> flatten(2) -> transpose(1,2)).
    """
    B, C, H, W = pixel_values.shape
    P = patch_size
    if weight.shape[1] != C:
        raise ValueError(
            "Make sure that the channel dimension of the pixel values match "
            f"with the one set in the configuration. Expected {weight.shape[1]} "
            f"but got {C}.")
    Hp, Wp = H // P, W // P
    num_patches = Hp * Wp
    hidden = weight.shape[0]
    K = C * P * P
    M, N = B * num_patches, hidden
    out_dtype = pixel_values.dtype

    # Compute dtype: bf16 operands, f32 accumulation in the MXU.
    cdt = jnp.bfloat16

    # im2col (layout only, matches Conv2d's (c, i, j) flattening order).
    # Cast to bf16 FIRST so the materialized transpose pass moves half the bytes.
    # TODO(synk): the transpose could be fused in-kernel via a per-(b,hp)
    # BlockSpec + XLU permute to remove this pass entirely.
    x = pixel_values.astype(cdt).reshape(B, C, Hp, P, Wp, P)
    x = x.transpose(0, 2, 4, 1, 3, 5).reshape(M, K)

    # Pre-transpose weight to (K, N) so the kernel is a plain x @ w.
    w = weight.reshape(hidden, K).T.astype(cdt)
    b = bias.reshape(1, N).astype(jnp.float32)

    # Pad K to a multiple of 128 only when cheap (e.g. 588 -> 640); zero rows
    # of w contribute nothing, so correctness is unaffected.
    Kp = _round_up(K, 128)
    if Kp != K and (Kp - K) <= max(K // 8, 1):
        x = jnp.pad(x, ((0, 0), (0, Kp - K)))
        w = jnp.pad(w, ((0, Kp - K), (0, 0)))
    else:
        Kp = K

    # Row tile: large (512) to amortize per-step overhead; no explicit M pad —
    # pl.cdiv grid + masked ragged last block instead.
    tm = min(512, _round_up(M, 8))
    grid_m = pl.cdiv(M, tm)

    c_item = jnp.dtype(cdt).itemsize
    o_item = jnp.dtype(out_dtype).itemsize
    cost = pl.CostEstimate(
        flops=2 * M * Kp * N + M * N,
        transcendentals=0,
        bytes_accessed=c_item * (M * Kp + Kp * N) + 4 * N + o_item * M * N)

    # VMEM budget: double-buffered x/out tiles + (resident, still 2-buffered)
    # weight + bias, with headroom. Capped at 64 MiB so it is valid on v7x too.
    buf_bytes = 2 * (tm * Kp * c_item + tm * N * o_item + Kp * N * c_item) + 4 * N
    vmem_limit = min(max(32 << 20, int(buf_bytes * 1.5) + (4 << 20)), 64 << 20)

    out = pl.pallas_call(
        _patch_proj_kernel,
        out_shape=jax.ShapeDtypeStruct((M, N), out_dtype),
        grid_spec=pltpu.PrefetchScalarGridSpec(
            num_scalar_prefetch=0,
            grid=(grid_m,),
            in_specs=[
                pl.BlockSpec((tm, Kp), lambda i: (i, 0)),   # patch rows (streamed)
                pl.BlockSpec((Kp, N), lambda i: (0, 0)),    # weight (resident)
                pl.BlockSpec((1, N), lambda i: (0, 0)),     # bias (resident)
            ],
            out_specs=pl.BlockSpec((tm, N), lambda i: (i, 0)),
        ),
        compiler_params=pltpu.CompilerParams(
            dimension_semantics=("parallel",),   # megacore splits M on v7x
            vmem_limit_bytes=vmem_limit),
        cost_estimate=cost,
    )(x, w, b)

    # Pure view: kernel already wrote [B*num_patches, hidden] in final layout.
    return out.reshape(B, num_patches, hidden)


def _reference(pixel_values, weight, bias, patch_size):
    # Exact Conv2d(kernel=P, stride=P) -> flatten(2) -> transpose(1, 2).
    out = jax.lax.conv_general_dilated(
        pixel_values, weight,
        window_strides=(patch_size, patch_size),
        padding="VALID",
        dimension_numbers=("NCHW", "OIHW", "NCHW"),
        precision=jax.lax.Precision.HIGHEST)
    out = out + bias.reshape(1, -1, 1, 1)
    B, D, Hp, Wp = out.shape
    return out.reshape(B, D, Hp * Wp).transpose(0, 2, 1)


if __name__ == "__main__":
    # Small shapes consistent with the module: batch=2, channels=3,
    # image=16, patch=4 (-> 16 patches), hidden_size=32.
    B, C, image_size, patch_size, hidden_size = 2, 3, 16, 4, 32

    key = jax.random.PRNGKey(0)
    kx, kw, kb = jax.random.split(key, 3)
    pixel_values = jax.random.normal(kx, (B, C, image_size, image_size),
                                     dtype=jnp.float32)
    weight = jax.random.normal(
        kw, (hidden_size, C, patch_size, patch_size), jnp.float32) * 0.05
    bias = jax.random.normal(kb, (hidden_size,), jnp.float32) * 0.05

    out = dinov2_patch_embeddings(pixel_values, weight, bias, patch_size)
    out = jax.block_until_ready(out)

    num_patches = (image_size // patch_size) ** 2
    assert out.shape == (B, num_patches, hidden_size)

    # Compare against the conv reference evaluated on the same bf16-rounded
    # operands (kernel compute dtype); accumulation is f32 on both sides.
    ref = _reference(
        pixel_values.astype(jnp.bfloat16).astype(jnp.float32),
        weight.astype(jnp.bfloat16).astype(jnp.float32),
        bias, patch_size)
    assert jnp.allclose(out, ref, atol=1e-2, rtol=1e-2), "mismatch vs reference"

    print("KERNEL_OK")
</pallas_src>

<mosaic_0001>
module attributes {stable_mosaic.version = 11 : i64} {
  func.func @_patch_proj_kernel(%arg0: i32, %arg1: memref<32x48xbf16, #tpu.memory_space<vmem>>, %arg2: memref<48x32xbf16, #tpu.memory_space<vmem>>, %arg3: memref<1x32xf32, #tpu.memory_space<vmem>>, %arg4: memref<32x32xf32, #tpu.memory_space<vmem>>) attributes {dimension_semantics = [#tpu.dimension_semantics<parallel>], iteration_bounds = array<i64: 1>, scalar_prefetch = 0 : i64, scratch_operands = 0 : i64, tpu.core_type = #tpu.core_type<tc>, window_params = [{transform_indices = @transform_0, window_bounds = array<i64: 32, 48>}, {pipeline_mode = #tpu.pipeline_mode<synchronous>, transform_indices = @transform_1, window_bounds = array<i64: 48, 32>}, {pipeline_mode = #tpu.pipeline_mode<synchronous>, transform_indices = @transform_2, window_bounds = array<i64: 1, 32>}, {transform_indices = @transform_3, window_bounds = array<i64: 32, 32>}]} {
    %c0 = arith.constant 0 : index
    %c0_0 = arith.constant 0 : index
    %0 = vector.load %arg1[%c0, %c0_0] : memref<32x48xbf16, #tpu.memory_space<vmem>>, vector<32x48xbf16>
    %c0_1 = arith.constant 0 : index
    %c0_2 = arith.constant 0 : index
    %1 = vector.load %arg2[%c0_1, %c0_2] : memref<48x32xbf16, #tpu.memory_space<vmem>>, vector<48x32xbf16>
    %cst = arith.constant dense<0.000000e+00> : vector<32x32xf32>
    %2 = tpu.matmul %0, %1, %cst {dimension_numbers = #tpu.dot_dimension_numbers<[1], [0], [0], [1], [0, 0, 1, 1], [], []>} : vector<32x48xbf16>, vector<48x32xbf16>, vector<32x32xf32> -> vector<32x32xf32>
    %c0_3 = arith.constant 0 : index
    %c0_4 = arith.constant 0 : index
    %3 = vector.load %arg3[%c0_3, %c0_4] : memref<1x32xf32, #tpu.memory_space<vmem>>, vector<1x32xf32>
    %4 = vector.broadcast %3 : vector<1x32xf32> to vector<32x32xf32>
    %5 = arith.addf %2, %4 : vector<32x32xf32>
    %c0_5 = arith.constant 0 : index
    %c0_6 = arith.constant 0 : index
    %6 = vector.load %arg4[%c0_5, %c0_6] : memref<32x32xf32, #tpu.memory_space<vmem>>, vector<32x32xf32>
    tpu.vector_store %arg4[%c0_5, %c0_6], %5 {strides = array<i32>} : memref<32x32xf32, #tpu.memory_space<vmem>>, vector<32x32xf32>,
    return
  }
  func.func @transform_0(%arg0: i32) -> (i32, i32) {
    %c0_i32 = arith.constant 0 : i32
    %c0_i32_0 = arith.constant 0 : i32
    return %arg0, %c0_i32 : i32, i32
  }
  func.func @transform_1(%arg0: i32) -> (i32, i32) {
    %c0_i32 = arith.constant 0 : i32
    %c0_i32_0 = arith.constant 0 : i32
    %c0_i32_1 = arith.constant 0 : i32
    return %c0_i32, %c0_i32_0 : i32, i32
  }
  func.func @transform_2(%arg0: i32) -> (i32, i32) {
    %c0_i32 = arith.constant 0 : i32
    %c0_i32_0 = arith.constant 0 : i32
    %c0_i32_1 = arith.constant 0 : i32
    return %c0_i32, %c0_i32_0 : i32, i32
  }
  func.func @transform_3(%arg0: i32) -> (i32, i32) {
    %c0_i32 = arith.constant 0 : i32
    %c0_i32_0 = arith.constant 0 : i32
    return %arg0, %c0_i32 : i32, i32
  }
}

</mosaic_0001>

<llo_original>
// kernel: tpu_custom_call.1
$region0: #{tpu_custom_call.1}
  #allocation0 [shape = 'u32[]', space=smem, size = 0x4, offset = 0x4, fixed_abs, tag = 'smem constant byte address 0x4 - core index']
  #allocation1 [shape = 'u32[72,128]{1,0:T(1,128)}', space=vmem, size = 0x9000, scoped, tag = 'internal scratch']
  %s0 = inlined_call_operand.vmem [shape: bf16[32,48], index: 0, kind: input, shape index: {}]
  %s1 = inlined_call_operand.vmem [shape: bf16[48,32], index: 1, kind: input, shape index: {}]
  %s2 = inlined_call_operand.vmem [shape: f32[1,32], index: 2, kind: input, shape index: {}]
  %s3 = inlined_call_operand.hbm [shape: f32[32,32], index: 3, kind: output, shape index: {}]
  %s4 = sld [smem:[#allocation0]]
  $region22: #{tpu_custom_call.1} parent=0
    _
  %s6 = ssub.s32 1, %s4
  %s7 = scalar_select 0, %s6, %s4
  $region1: #{tpu_custom_call.1} parent=0
    #allocation2 [shape = 'u8[16384]{0}', space=vmem, size = 0x4000, scoped, tag = 'output window, operand 0, single buffered']
    #allocation3 [shape = 's32[1]{0}', space=sflag, size = 0x4, scoped, tag = 'scoped memory for tpu_custom_call.1']
    %8 = vsyncpa [#allocation3], 0
    // Predicated region
    $region2: #{tpu_custom_call.1} parent=1 // pred_check
      _
    $region3: #{tpu_custom_call.1} parent=1 // pred_check_branch
      %10 = sbr.rel (0) target = $region5
    $region4: #{tpu_custom_call.1} parent=1 // pred_region
      _
    $region5: #{tpu_custom_call.1} parent=1 // pred_fallthru
      _
    // Predicated region
    $region6: #{tpu_custom_call.1} parent=1 // pred_check
      _
    $region7: #{tpu_custom_call.1} parent=1 // pred_check_branch
      %12 = sbr.rel (0) target = $region9
    $region8: #{tpu_custom_call.1} parent=1 // pred_region
      _
    $region9: #{tpu_custom_call.1} parent=1 // pred_fallthru
      _
    // Predicated region
    $region10: #{tpu_custom_call.1} parent=1 // pred_check
      _
    $region11: #{tpu_custom_call.1} parent=1 // pred_check_branch
      %14 = sbr.rel (0) target = $region13
    $region12: #{tpu_custom_call.1} parent=1 // pred_region
      _
    $region13: #{tpu_custom_call.1} parent=1 // pred_fallthru
      _
    %v16 = vld [vmem:[%s0] sm:$0xf]
    %v17 = vld [vmem:[%s0 + $0x4] sm:$0xf]
    %v18 = vld [vmem:[%s0 + $0x8] sm:$0xf]
    %v19 = vld [vmem:[%s0 + $0xc] sm:$0xf]
    %v20 = vld [vmem:[%s1] sm:$0xf]
    %v21 = vld [vmem:[%s1 + $0x4] sm:$0xf]
    %v22 = vld [vmem:[%s1 + $0x8] sm:$0xf]
    %v23 = vld [vmem:[%s1 + $0xc] sm:$0xf]
    %v24 = vld [vmem:[%s1 + $0x10] sm:$0xf]
    %v25 = vld [vmem:[%s1 + $0x14] sm:$0xf]
    %v26 = vld [vmem:[%s2] sm:$0x1]
    %v28 = vperm.slane %v26, 0
    %v34 = vunpack.c.l.b16 %v16
    %v35 = vunpack.c.l.b16 %v17
    %v36 = vunpack.c.l.b16 %v18
    %v37 = vunpack.c.l.b16 %v19
    %v38 = vpack.c.b16 %v35, %v34
    %v39 = vpack.c.b16 %v37, %v36
    %v46 = vunpack.c.l.b16 %v20
    %v47 = vunpack.c.l.b16 %v21
    %v48 = vunpack.c.l.b16 %v22
    %v49 = vunpack.c.l.b16 %v23
    %v50 = vunpack.c.l.b16 %v24
    %v51 = vunpack.c.l.b16 %v25
    %v52 = vpack.c.b16 %v47, %v46
    %v53 = vpack.c.b16 %v49, %v48
    %v54 = vpack.c.b16 %v51, %v50
    %vm58 = vcmask 392192
    %v60 = vsel %vm58, %v38, 0
    %v63 = vsel %vm58, %v39, 0
    %65 = vmatpush.bf16.msra.mxu0 0
    %66 = vmatpush.bf16.msra.mxu0 0
    %67 = vmatpush.bf16.msra.mxu0 0
    %68 = vmatpush.bf16.msra.mxu0 0
    %69 = vmatpush.bf16.msra.mxu0 0
    %70 = vmatpush.bf16.msra.mxu0 %v54
    %71 = vmatpush.bf16.msra.mxu0 %v53
    %72 = vmatpush.bf16.msra.mxu0 %v52
    %73 = vmatmul.bf16.gmra.mxu0 %v60
    %v74 = vpop.f32.mrf.mxu0
    %v75 = vadd.f32 %v28, %v74
    %v76 = vpop.f32.mrf.mxu0
    %v77 = vadd.f32 %v28, %v76
    %78 = vmatmul.bf16.gmra.mxu0 %v63
    %v79 = vpop.f32.mrf.mxu0
    %v80 = vadd.f32 %v28, %v79
    %v81 = vpop.f32.mrf.mxu0
    %v82 = vadd.f32 %v28, %v81
    %83 = vdwg.mxu0
    %vm84 = vcmask 261120
    %85 = vst.msk [vmem:[#allocation2] sm:$0xff] %vm84, %v75
    %86 = vst.msk [vmem:[#allocation2 + $0x8] sm:$0xff] %vm84, %v77
    %87 = vst.msk [vmem:[#allocation2 + $0x10] sm:$0xff] %vm84, %v80
    %88 = vst.msk [vmem:[#allocation2 + $0x18] sm:$0xff] %vm84, %v82
    // Predicated region
    $region14: #{tpu_custom_call.1} parent=1 // pred_check
      _
    $region15: #{tpu_custom_call.1} parent=1 // pred_check_branch
      %90 = sbr.rel (0) target = $region17
    $region16: #{tpu_custom_call.1} parent=1 // pred_region
      %92 = vsyncadd [#allocation3], 0
      %s93 = sshll.u32 [#allocation2], 4
      %s94 = int_to_ptr.vmem [resolvable:$true] %s93
      %s95 = sshll.u32 %s3, 4
      %s96 = int_to_ptr.hbm [resolvable:$true] %s95
      %101 = dma.vmem_to_hbm [thread:$0]  %s94, 512, %s96, [#allocation3], 128, 128, 8
    $region17: #{tpu_custom_call.1} parent=1 // pred_fallthru
      _
    // Predicated region
    $region18: #{tpu_custom_call.1} parent=1 // pred_check
      _
    $region19: #{tpu_custom_call.1} parent=1 // pred_check_branch
      %103 = sbr.rel (0) target = $region21
    $region20: #{tpu_custom_call.1} parent=1 // pred_region
      %105 = dma.done [#allocation3], 512
    $region21: #{tpu_custom_call.1} parent=1 // pred_fallthru
      _
    %106 = vsyncpa [#allocation3], 1

</llo_original>
